<compile_context>
chip_gen: v5e
topology: v5e:2x2
jax: 0.10.0
libtpu: 0.0.40
codegen_flags: <defaults>
</compile_context>

<pallas_src>
import math

import jax
import jax.numpy as jnp
from jax import lax
from jax.experimental import pallas as pl
from jax.experimental.pallas import tpu as pltpu


_NEG_MASK = -1000000.0   # same fill value as the PyTorch sequence_mask


def _largest_divisor_tile(dim, target, quantum=8):
    """Largest divisor of `dim` that is <= target and a multiple of `quantum`.

    Falls back to the full dim, which is always a legal BlockSpec block size.
    """
    if dim <= target:
        return dim
    start = (target // quantum) * quantum
    for cand in range(start, 0, -quantum):
        if dim % cand == 0:
            return cand
    return dim


def _vmem_budget_and_limit():
    """Generation-aware VMEM budget (tile sizing) and vmem_limit_bytes."""
    cap = 64 * 1024 * 1024                     # conservative fallback (v7x per-TC)
    try:
        info = pltpu.get_tpu_info()
        cap = int(getattr(info, "vmem_capacity_bytes", cap))
    except Exception:
        pass
    # ~96 MiB limit on 128 MiB parts (v5e/v6e), ~48 MiB on v7x (64 MiB/TC).
    limit = min((cap * 3) // 4, cap - (8 << 20))
    budget = (limit * 3) // 4                  # headroom for double-buffered DMA etc.
    return budget, limit


def _estimate_vmem_bytes(bblk, qblk, kblk, d, dvp, in_bytes, mxu_bytes):
    dbl_in = 2 * bblk * (qblk * d + kblk * d + kblk * dvp) * in_bytes  # double-buffered inputs
    dbl_out = 2 * bblk * qblk * dvp * in_bytes                         # double-buffered output
    scratch = bblk * qblk * (dvp + 2) * 4 + bblk * qblk * d * mxu_bytes  # m, l, acc, q_scaled
    live = bblk * qblk * kblk * (2 * 4 + mxu_bytes)                    # s, p (f32) + p cast copy
    casts = bblk * kblk * (d + dvp) * mxu_bytes                        # k/v cast temporaries
    return dbl_in + dbl_out + scratch + live + casts


def _choose_tiles(b, q, k, d, dvp, in_bytes, mxu_bytes, budget):
    q_target, k_target = (512, 1024) if budget >= (32 << 20) else (256, 512)
    qblk = _largest_divisor_tile(q, q_target, quantum=8)
    kblk = _largest_divisor_tile(k, k_target, quantum=128)   # lane/MXU aligned

    def fits(bb, qb, kb):
        return _estimate_vmem_bytes(bb, qb, kb, d, dvp, in_bytes, mxu_bytes) <= budget

    # Shrink a single-batch tile until it fits (divisibility & 8-alignment kept).
    while not fits(1, qblk, kblk):
        if kblk >= 256 and kblk % 2 == 0 and (kblk // 2) % 8 == 0:
            kblk //= 2
        elif qblk >= 16 and qblk % 2 == 0 and (qblk // 2) % 8 == 0:
            qblk //= 2
        else:
            break

    bblk = 1
    for cand in range(1, b + 1):
        if b % cand:
            continue
        if not fits(cand, qblk, kblk):
            break
        bblk = cand
        if cand * qblk >= 512:   # enough rows per step to amortize grid overhead
            break
    return bblk, qblk, kblk


def _build_kernel(*, mask_mode, row_lane_dense, fuse_sum, bblk, qblk, kblk, nkb,
                  dv, scale, mxu_dtype, approx_recip):
    """mask_mode: 'none' | 'per_batch' (1-D valid_lens) | 'per_row' (2-D valid_lens)."""

    def _body(vl_sp_ref, vl_row_ref, q_ref, k_ref, v_ref, o_ref,
              m_sc, l_sc, acc_sc, q_sc):
        ki = pl.program_id(2)

        @pl.when(ki == 0)
        def _init():
            m_sc[...] = jnp.full_like(m_sc, -jnp.inf)
            if not fuse_sum:
                l_sc[...] = jnp.zeros_like(l_sc)
            acc_sc[...] = jnp.zeros_like(acc_sc)
            # q's block is constant across ki: fold 1/sqrt(d) + cast ONCE into
            # VMEM scratch and reuse for every K step.
            q_sc[...] = (q_ref[...].astype(jnp.float32) * scale).astype(mxu_dtype)

        q = q_sc[...]
        k = k_ref[...].astype(mxu_dtype)

        # Contract on the last dim of both operands -- no explicit K transpose.
        s = jnp.einsum("bqd,bkd->bqk", q, k, preferred_element_type=jnp.float32)

        if mask_mode != "none":
            key_pos = lax.broadcasted_iota(jnp.int32, (bblk, qblk, kblk), 2) + ki * kblk
            if mask_mode == "per_batch":
                # Per-batch valid lengths live in SMEM (scalar prefetch); build a
                # tiny (Bblk,1,1) vector and apply ONE broadcasted where.
                b0 = pl.program_id(0) * bblk
                if bblk == 1:
                    vlen = vl_sp_ref[b0]
                else:
                    bidx = lax.broadcasted_iota(jnp.int32, (bblk, 1, 1), 0)
                    vlen = jnp.zeros((bblk, 1, 1), jnp.int32)
                    for bi in range(bblk):
                        vlen = jnp.where(bidx == bi, vl_sp_ref[b0 + bi], vlen)
            else:  # per_row
                if row_lane_dense:
                    # (Bblk, 1, Qblk) lane-dense tile -> (Bblk, Qblk, 1)
                    vlen = vl_row_ref[...].reshape(bblk, qblk, 1)
                else:
                    vlen = vl_row_ref[...]
            s = jnp.where(key_pos < vlen, s, _NEG_MASK)

        # TODO(synk): with scalar-prefetched valid_lens the K blocks past
        # max(valid_len) of this batch block could be skipped; needs a special
        # case for valid_len == 0 rows (reference gives uniform weights there).

        # Flash-style online softmax over the K grid axis (all math in f32).
        m_prev = m_sc[...]
        m_new = jnp.maximum(m_prev, jnp.max(s, axis=-1, keepdims=True))
        alpha = jnp.exp(m_prev - m_new)
        p_f32 = jnp.exp(s - m_new)
        p = p_f32.astype(mxu_dtype)

        # When fuse_sum, v carries an appended ones column so this single MXU
        # matmul produces [p@V | sum(p)] -- no XLU row-sum needed.
        pv = jnp.einsum("bqk,bkv->bqv", p, v_ref[...].astype(mxu_dtype),
                        preferred_element_type=jnp.float32)
        acc_sc[...] = alpha * acc_sc[...] + pv
        if not fuse_sum:
            l_sc[...] = alpha * l_sc[...] + jnp.sum(p_f32, axis=-1, keepdims=True)
        m_sc[...] = m_new

        @pl.when(ki == nkb - 1)
        def _finalize():
            # Normalize the (Q, Dv) output instead of the (Q, K) weights;
            # reciprocal goes to the EUP slot.
            # TODO(synk): nn.Dropout is identity in eval mode; training-mode
            # dropout on the attention weights is not implemented.
            if fuse_sum:
                inv_l = pl.reciprocal(acc_sc[:, :, dv:dv + 1], approx=approx_recip)
                o_ref[...] = (acc_sc[:, :, 0:dv] * inv_l).astype(o_ref.dtype)
            else:
                inv_l = pl.reciprocal(l_sc[...], approx=approx_recip)
                o_ref[...] = (acc_sc[...] * inv_l).astype(o_ref.dtype)

    if mask_mode == "per_row":
        def kernel(vl_sp_ref, vl_row_ref, q_ref, k_ref, v_ref, o_ref,
                   m_sc, l_sc, acc_sc, q_sc):
            _body(vl_sp_ref, vl_row_ref, q_ref, k_ref, v_ref, o_ref,
                  m_sc, l_sc, acc_sc, q_sc)
    else:
        def kernel(vl_sp_ref, q_ref, k_ref, v_ref, o_ref, m_sc, l_sc, acc_sc, q_sc):
            _body(vl_sp_ref, None, q_ref, k_ref, v_ref, o_ref,
                  m_sc, l_sc, acc_sc, q_sc)
    return kernel


def dot_product_attention(queries, keys, values, valid_lens=None, *,
                          mxu_dtype=jnp.bfloat16):
    """Pallas equivalent of DotProductAttention.forward (eval mode, dropout=0).

    mxu_dtype: dtype of the MXU matmul operands. Defaults to bfloat16 (f32
    accumulation + f32 softmax math are always kept); pass jnp.float32 for full
    precision at lower MXU throughput (not recommended on v7x, whose MXU is
    bf16/fp8-only). Feeding bf16 Q/K/V from the producer halves HBM traffic and
    removes the in-kernel casts.
    """
    queries = jnp.asarray(queries)
    keys = jnp.asarray(keys)
    values = jnp.asarray(values)

    B, Q, D = queries.shape
    Bk, K, Dk = keys.shape
    Bv, Kv, Dv = values.shape
    assert (Bk, Dk) == (B, D) and (Bv, Kv) == (B, K)

    scale = 1.0 / math.sqrt(D)
    mxu_dtype = jnp.dtype(mxu_dtype)
    in_bytes = max(queries.dtype.itemsize, keys.dtype.itemsize, values.dtype.itemsize)
    mxu_bytes = mxu_dtype.itemsize

    # Fuse the softmax row-sum into the PV matmul by appending a ones column to V
    # (free layout-wise whenever Dv is not already a 128-lane multiple).
    fuse_sum = (Dv % 128) != 0
    Dvp = Dv + 1 if fuse_sum else Dv
    values_in = values
    if fuse_sum:
        values_in = jnp.concatenate(
            [values, jnp.ones((B, K, 1), values.dtype)], axis=-1)

    budget, vmem_limit = _vmem_budget_and_limit()
    Bblk, Qblk, Kblk = _choose_tiles(B, Q, K, D, Dvp, in_bytes, mxu_bytes, budget)
    nkb = K // Kblk
    grid = (B // Bblk, Q // Qblk, nkb)

    # Normalize valid_lens (mirrors masked_softmax / repeat_interleave).
    vl_rows = None
    row_lane_dense = False
    if valid_lens is None:
        mask_mode = "none"
        vl_sp = jnp.zeros((B,), jnp.int32)                 # unused placeholder
    else:
        vl = jnp.asarray(valid_lens)
        if vl.ndim == 1:
            mask_mode = "per_batch"
            vl_sp = vl.astype(jnp.int32)                   # (B,) int32 -> SMEM
        else:
            mask_mode = "per_row"
            vl_sp = jnp.zeros((B,), jnp.int32)             # unused placeholder
            row_lane_dense = (Qblk % 128 == 0) or (Qblk == Q)
            if row_lane_dense:
                vl_rows = vl.astype(jnp.int32).reshape(B, 1, Q)   # lane-dense (Q last)
            else:
                # TODO(synk): lane-width-1 fallback when Qblk is not 128-aligned.
                vl_rows = vl.astype(jnp.int32).reshape(B, Q, 1)

    # Approximate (EUP) reciprocal only on the bf16 fast path, where its error is
    # negligible relative to the operand rounding; exact reciprocal otherwise.
    approx_recip = (mxu_dtype == jnp.dtype(jnp.bfloat16))

    kernel = _build_kernel(mask_mode=mask_mode, row_lane_dense=row_lane_dense,
                           fuse_sum=fuse_sum, bblk=Bblk, qblk=Qblk, kblk=Kblk,
                           nkb=nkb, dv=Dv, scale=scale, mxu_dtype=mxu_dtype,
                           approx_recip=approx_recip)

    q_spec = pl.BlockSpec((Bblk, Qblk, D), lambda b, qi, ki, vl: (b, qi, 0))
    k_spec = pl.BlockSpec((Bblk, Kblk, D), lambda b, qi, ki, vl: (b, ki, 0))
    v_spec = pl.BlockSpec((Bblk, Kblk, Dvp), lambda b, qi, ki, vl: (b, ki, 0))
    o_spec = pl.BlockSpec((Bblk, Qblk, Dv), lambda b, qi, ki, vl: (b, qi, 0))

    in_specs = [q_spec, k_spec, v_spec]
    args = (vl_sp, queries, keys, values_in)
    if mask_mode == "per_row":
        if row_lane_dense:
            vlr_spec = pl.BlockSpec((Bblk, 1, Qblk), lambda b, qi, ki, vl: (b, 0, qi))
        else:
            vlr_spec = pl.BlockSpec((Bblk, Qblk, 1), lambda b, qi, ki, vl: (b, qi, 0))
        in_specs = [vlr_spec] + in_specs
        args = (vl_sp, vl_rows, queries, keys, values_in)

    grid_spec = pltpu.PrefetchScalarGridSpec(
        num_scalar_prefetch=1,
        grid=grid,
        in_specs=in_specs,
        out_specs=o_spec,
        scratch_shapes=[
            pltpu.VMEM((Bblk, Qblk, 1), jnp.float32),    # running max
            pltpu.VMEM((Bblk, Qblk, 1), jnp.float32),    # running denom (unused when fused)
            pltpu.VMEM((Bblk, Qblk, Dvp), jnp.float32),  # output (+denominator) accumulator
            pltpu.VMEM((Bblk, Qblk, D), mxu_dtype),      # pre-scaled / pre-cast q
        ],
    )

    return pl.pallas_call(
        kernel,
        out_shape=jax.ShapeDtypeStruct((B, Q, Dv), queries.dtype),
        grid_spec=grid_spec,
        compiler_params=pltpu.CompilerParams(
            dimension_semantics=("parallel", "parallel", "arbitrary"),
            vmem_limit_bytes=vmem_limit,
        ),
    )(*args)


def _reference(queries, keys, values, valid_lens):
    """Plain-JAX mirror of the PyTorch module (eval mode)."""
    B, Q, D = queries.shape
    K = keys.shape[1]
    scores = jnp.einsum("bqd,bkd->bqk", queries, keys) / math.sqrt(D)
    if valid_lens is not None:
        vl = jnp.asarray(valid_lens)
        if vl.ndim == 1:
            vl = jnp.repeat(vl, Q)        # repeat_interleave over the query dim
        else:
            vl = vl.reshape(-1)
        flat = scores.reshape(-1, K)
        mask = jnp.arange(K)[None, :] < vl[:, None]
        flat = jnp.where(mask, flat, _NEG_MASK)
        scores = flat.reshape(B, Q, K)
    weights = jax.nn.softmax(scores, axis=-1)
    return jnp.einsum("bqk,bkv->bqv", weights, values)


if __name__ == "__main__":
    key = jax.random.PRNGKey(0)
    kq, kk, kv = jax.random.split(key, 3)

    B, Q, K, D, Dv = 2, 8, 8, 32, 16
    queries = jax.random.normal(kq, (B, Q, D), dtype=jnp.float32)
    keys = jax.random.normal(kk, (B, K, D), dtype=jnp.float32)
    values = jax.random.normal(kv, (B, K, Dv), dtype=jnp.float32)
    valid_lens = jnp.array([3, 6], dtype=jnp.int32)

    # Tolerances: the TPU MXU may evaluate f32 matmuls with bf16 operand passes,
    # and the kernel uses a mathematically equivalent but reordered algorithm
    # (scale folded into q, flash-style softmax, fused denominator, post-matmul
    # normalization), so exact bitwise agreement with XLA is not expected.
    ref = _reference(queries, keys, values, valid_lens)

    # Full-precision MXU path, 1-D valid_lens (scalar-prefetch mask).
    out_f32 = jax.block_until_ready(
        dot_product_attention(queries, keys, values, valid_lens,
                              mxu_dtype=jnp.float32))
    assert out_f32.shape == (B, Q, Dv)
    assert jnp.allclose(out_f32, ref, atol=5e-2, rtol=5e-2), "f32 path mismatch"

    # Default bf16-MXU fast path (f32 accumulation + f32 softmax).
    out_bf16 = jax.block_until_ready(
        dot_product_attention(queries, keys, values, valid_lens))
    assert jnp.allclose(out_bf16, ref, atol=1e-1, rtol=1e-1), "bf16 path mismatch"

    # No masking (valid_lens=None).
    ref_nm = _reference(queries, keys, values, None)
    out_nm = jax.block_until_ready(
        dot_product_attention(queries, keys, values, None, mxu_dtype=jnp.float32))
    assert jnp.allclose(out_nm, ref_nm, atol=5e-2, rtol=5e-2), "no-mask mismatch"

    # Per-row (2-D) valid_lens (lane-dense path).
    vl2 = jnp.array([[1, 2, 3, 4, 5, 6, 7, 8],
                     [8, 7, 6, 5, 4, 3, 2, 1]], dtype=jnp.int32)
    ref_2d = _reference(queries, keys, values, vl2)
    out_2d = jax.block_until_ready(
        dot_product_attention(queries, keys, values, vl2, mxu_dtype=jnp.float32))
    assert jnp.allclose(out_2d, ref_2d, atol=5e-2, rtol=5e-2), "per-row mismatch"

    print("KERNEL_OK")
</pallas_src>

<mosaic_0001>
module attributes {stable_mosaic.version = 11 : i64} {
  func.func @kernel(%arg0: i32, %arg1: i32, %arg2: i32, %arg3: memref<2xi32, #tpu.memory_space<smem>>, %arg4: memref<2x8x32xf32, #tpu.memory_space<vmem>>, %arg5: memref<2x8x32xf32, #tpu.memory_space<vmem>>, %arg6: memref<2x8x17xf32, #tpu.memory_space<vmem>>, %arg7: memref<2x8x16xf32, #tpu.memory_space<vmem>>, %arg8: memref<2x8x1xf32, #tpu.memory_space<vmem>>, %arg9: memref<2x8x1xf32, #tpu.memory_space<vmem>>, %arg10: memref<2x8x17xf32, #tpu.memory_space<vmem>>, %arg11: memref<2x8x32xf32, #tpu.memory_space<vmem>>) attributes {dimension_semantics = [#tpu.dimension_semantics<parallel>, #tpu.dimension_semantics<parallel>, #tpu.dimension_semantics<arbitrary>], iteration_bounds = array<i64: 1, 1, 1>, scalar_prefetch = 1 : i64, scratch_operands = 4 : i64, tpu.core_type = #tpu.core_type<tc>, window_params = [{transform_indices = @transform_0, window_bounds = array<i64: 2, 8, 32>}, {transform_indices = @transform_1, window_bounds = array<i64: 2, 8, 32>}, {transform_indices = @transform_2, window_bounds = array<i64: 2, 8, 17>}, {transform_indices = @transform_3, window_bounds = array<i64: 2, 8, 16>}]} {
    %c0_i32 = arith.constant 0 : i32
    %0 = arith.cmpi eq, %arg2, %c0_i32 : i32
    %1 = arith.extui %0 : i1 to i32
    %c0_i32_0 = arith.constant 0 : i32
    %2 = arith.cmpi ne, %1, %c0_i32_0 : i32
    scf.if %2 {
      %cst_30 = arith.constant 0xFF800000 : f32
      %51 = vector.broadcast %cst_30 : f32 to vector<2x8x1xf32>
      %c0_31 = arith.constant 0 : index
      %c0_32 = arith.constant 0 : index
      %c0_33 = arith.constant 0 : index
      %52 = vector.load %arg8[%c0_31, %c0_32, %c0_33] : memref<2x8x1xf32, #tpu.memory_space<vmem>>, vector<2x8x1xf32>
      tpu.vector_store %arg8[%c0_31, %c0_32, %c0_33], %51 {strides = array<i32>} : memref<2x8x1xf32, #tpu.memory_space<vmem>>, vector<2x8x1xf32>,
      %cst_34 = arith.constant 0.000000e+00 : f32
      %53 = vector.broadcast %cst_34 : f32 to vector<2x8x17xf32>
      %c0_35 = arith.constant 0 : index
      %c0_36 = arith.constant 0 : index
      %c0_37 = arith.constant 0 : index
      %54 = vector.load %arg10[%c0_35, %c0_36, %c0_37] : memref<2x8x17xf32, #tpu.memory_space<vmem>>, vector<2x8x17xf32>
      tpu.vector_store %arg10[%c0_35, %c0_36, %c0_37], %53 {strides = array<i32>} : memref<2x8x17xf32, #tpu.memory_space<vmem>>, vector<2x8x17xf32>,
      %c0_38 = arith.constant 0 : index
      %c0_39 = arith.constant 0 : index
      %c0_40 = arith.constant 0 : index
      %55 = vector.load %arg4[%c0_38, %c0_39, %c0_40] : memref<2x8x32xf32, #tpu.memory_space<vmem>>, vector<2x8x32xf32>
      %cst_41 = arith.constant 0.176776692 : f32
      %56 = vector.broadcast %cst_41 : f32 to vector<2x8x32xf32>
      %57 = arith.mulf %55, %56 : vector<2x8x32xf32>
      %c0_42 = arith.constant 0 : index
      %c0_43 = arith.constant 0 : index
      %c0_44 = arith.constant 0 : index
      %58 = vector.load %arg11[%c0_42, %c0_43, %c0_44] : memref<2x8x32xf32, #tpu.memory_space<vmem>>, vector<2x8x32xf32>
      tpu.vector_store %arg11[%c0_42, %c0_43, %c0_44], %57 {strides = array<i32>} : memref<2x8x32xf32, #tpu.memory_space<vmem>>, vector<2x8x32xf32>,
    } else {
    }
    %c0 = arith.constant 0 : index
    %c0_1 = arith.constant 0 : index
    %c0_2 = arith.constant 0 : index
    %3 = vector.load %arg11[%c0, %c0_1, %c0_2] : memref<2x8x32xf32, #tpu.memory_space<vmem>>, vector<2x8x32xf32>
    %c0_3 = arith.constant 0 : index
    %c0_4 = arith.constant 0 : index
    %c0_5 = arith.constant 0 : index
    %4 = vector.load %arg5[%c0_3, %c0_4, %c0_5] : memref<2x8x32xf32, #tpu.memory_space<vmem>>, vector<2x8x32xf32>
    "tpu.trace_start"() <{level = 10 : i32, message = "bqd,bkd->bqk"}> : () -> ()
    %cst = arith.constant dense<0.000000e+00> : vector<2x8x8xf32>
    %5 = tpu.matmul %3, %4, %cst {dimension_numbers = #tpu.dot_dimension_numbers<[2], [2], [1], [1], [0, 0, 0, 1, 1, 1], [0], [0]>} : vector<2x8x32xf32>, vector<2x8x32xf32>, vector<2x8x8xf32> -> vector<2x8x8xf32>
    "tpu.trace_stop"() : () -> ()
    %6 = tpu.iota {dimensions = array<i32: 2>} : vector<2x8x8xi32>
    %c8_i32 = arith.constant 8 : i32
    %7 = arith.muli %arg2, %c8_i32 : i32
    %8 = vector.broadcast %7 : i32 to vector<2x8x8xi32>
    %9 = arith.addi %6, %8 : vector<2x8x8xi32>
    %c2_i32 = arith.constant 2 : i32
    %10 = arith.muli %arg0, %c2_i32 : i32
    %11 = tpu.iota {dimensions = array<i32: 0>} : vector<2x1x1xi32>
    %c0_i32_6 = arith.constant 0 : i32
    %12 = vector.broadcast %c0_i32_6 : i32 to vector<2x1x1xi32>
    %c0_i32_7 = arith.constant 0 : i32
    %13 = vector.broadcast %c0_i32_7 : i32 to vector<2x1x1xi32>
    %14 = arith.cmpi eq, %11, %13 : vector<2x1x1xi32>
    %c0_i32_8 = arith.constant 0 : i32
    %15 = arith.addi %10, %c0_i32_8 : i32
    %16 = arith.index_cast %15 : i32 to index
    %17 = memref.load %arg3[%16] : memref<2xi32, #tpu.memory_space<smem>>
    %18 = vector.broadcast %17 : i32 to vector<2x1x1xi32>
    %19 = arith.select %14, %18, %12 : vector<2x1x1xi1>, vector<2x1x1xi32>
    %c1_i32 = arith.constant 1 : i32
    %20 = vector.broadcast %c1_i32 : i32 to vector<2x1x1xi32>
    %21 = arith.cmpi eq, %11, %20 : vector<2x1x1xi32>
    %c1_i32_9 = arith.constant 1 : i32
    %22 = arith.addi %10, %c1_i32_9 : i32
    %23 = arith.index_cast %22 : i32 to index
    %24 = memref.load %arg3[%23] : memref<2xi32, #tpu.memory_space<smem>>
    %25 = vector.broadcast %24 : i32 to vector<2x1x1xi32>
    %26 = arith.select %21, %25, %19 : vector<2x1x1xi1>, vector<2x1x1xi32>
    %27 = vector.broadcast %26 : vector<2x1x1xi32> to vector<2x8x8xi32>
    %28 = arith.cmpi slt, %9, %27 : vector<2x8x8xi32>
    %cst_10 = arith.constant -1.000000e+06 : f32
    %29 = vector.broadcast %cst_10 : f32 to vector<2x8x8xf32>
    %30 = arith.select %28, %5, %29 : vector<2x8x8xi1>, vector<2x8x8xf32>
    %c0_11 = arith.constant 0 : index
    %c0_12 = arith.constant 0 : index
    %c0_13 = arith.constant 0 : index
    %31 = vector.load %arg8[%c0_11, %c0_12, %c0_13] : memref<2x8x1xf32, #tpu.memory_space<vmem>>, vector<2x8x1xf32>
    %cst_14 = arith.constant dense<0xFF800000> : vector<2x8xf32>
    %32 = vector.multi_reduction <maximumf>, %30, %cst_14 [2] : vector<2x8x8xf32> to vector<2x8xf32>
    %33 = vector.shape_cast %32 : vector<2x8xf32> to vector<2x8x1xf32>
    %34 = arith.maximumf %31, %33 : vector<2x8x1xf32>
    %35 = arith.subf %31, %34 : vector<2x8x1xf32>
    %36 = math.exp %35 : vector<2x8x1xf32>
    %37 = vector.broadcast %34 : vector<2x8x1xf32> to vector<2x8x8xf32>
    %38 = arith.subf %30, %37 : vector<2x8x8xf32>
    %39 = math.exp %38 : vector<2x8x8xf32>
    %c0_15 = arith.constant 0 : index
    %c0_16 = arith.constant 0 : index
    %c0_17 = arith.constant 0 : index
    %40 = vector.load %arg6[%c0_15, %c0_16, %c0_17] : memref<2x8x17xf32, #tpu.memory_space<vmem>>, vector<2x8x17xf32>
    "tpu.trace_start"() <{level = 10 : i32, message = "bqk,bkv->bqv"}> : () -> ()
    %cst_18 = arith.constant dense<0.000000e+00> : vector<2x8x17xf32>
    %41 = tpu.matmul %39, %40, %cst_18 {dimension_numbers = #tpu.dot_dimension_numbers<[2], [1], [1], [2], [0, 0, 0, 1, 1, 2], [0], [0]>} : vector<2x8x8xf32>, vector<2x8x17xf32>, vector<2x8x17xf32> -> vector<2x8x17xf32>
    "tpu.trace_stop"() : () -> ()
    %c0_19 = arith.constant 0 : index
    %c0_20 = arith.constant 0 : index
    %c0_21 = arith.constant 0 : index
    %42 = vector.load %arg10[%c0_19, %c0_20, %c0_21] : memref<2x8x17xf32, #tpu.memory_space<vmem>>, vector<2x8x17xf32>
    %43 = vector.broadcast %36 : vector<2x8x1xf32> to vector<2x8x17xf32>
    %44 = arith.mulf %43, %42 : vector<2x8x17xf32>
    %45 = arith.addf %44, %41 : vector<2x8x17xf32>
    %c0_22 = arith.constant 0 : index
    %c0_23 = arith.constant 0 : index
    %c0_24 = arith.constant 0 : index
    %46 = vector.load %arg10[%c0_22, %c0_23, %c0_24] : memref<2x8x17xf32, #tpu.memory_space<vmem>>, vector<2x8x17xf32>
    tpu.vector_store %arg10[%c0_22, %c0_23, %c0_24], %45 {strides = array<i32>} : memref<2x8x17xf32, #tpu.memory_space<vmem>>, vector<2x8x17xf32>,
    %c0_25 = arith.constant 0 : index
    %c0_26 = arith.constant 0 : index
    %c0_27 = arith.constant 0 : index
    %47 = vector.load %arg8[%c0_25, %c0_26, %c0_27] : memref<2x8x1xf32, #tpu.memory_space<vmem>>, vector<2x8x1xf32>
    tpu.vector_store %arg8[%c0_25, %c0_26, %c0_27], %34 {strides = array<i32>} : memref<2x8x1xf32, #tpu.memory_space<vmem>>, vector<2x8x1xf32>,
    %c0_i32_28 = arith.constant 0 : i32
    %48 = arith.cmpi eq, %arg2, %c0_i32_28 : i32
    %49 = arith.extui %48 : i1 to i32
    %c0_i32_29 = arith.constant 0 : i32
    %50 = arith.cmpi ne, %49, %c0_i32_29 : i32
    scf.if %50 {
      %c0_30 = arith.constant 0 : index
      %c0_31 = arith.constant 0 : index
      %c16 = arith.constant 16 : index
      %51 = vector.load %arg10[%c0_30, %c0_31, %c16] : memref<2x8x17xf32, #tpu.memory_space<vmem>>, vector<2x8x1xf32>
      %52 = tpu.reciprocal %51 : vector<2x8x1xf32> -> vector<2x8x1xf32>
      %c0_32 = arith.constant 0 : index
      %c0_33 = arith.constant 0 : index
      %c0_34 = arith.constant 0 : index
      %53 = vector.load %arg10[%c0_32, %c0_33, %c0_34] : memref<2x8x17xf32, #tpu.memory_space<vmem>>, vector<2x8x16xf32>
      %54 = vector.broadcast %52 : vector<2x8x1xf32> to vector<2x8x16xf32>
      %55 = arith.mulf %53, %54 : vector<2x8x16xf32>
      %c0_35 = arith.constant 0 : index
      %c0_36 = arith.constant 0 : index
      %c0_37 = arith.constant 0 : index
      %56 = vector.load %arg7[%c0_35, %c0_36, %c0_37] : memref<2x8x16xf32, #tpu.memory_space<vmem>>, vector<2x8x16xf32>
      tpu.vector_store %arg7[%c0_35, %c0_36, %c0_37], %55 {strides = array<i32>} : memref<2x8x16xf32, #tpu.memory_space<vmem>>, vector<2x8x16xf32>,
    } else {
    }
    return
  }
  func.func @transform_0(%arg0: i32, %arg1: i32, %arg2: i32, %arg3: memref<2xi32, #tpu.memory_space<smem>>) -> (i32, i32, i32) {
    %c0_i32 = arith.constant 0 : i32
    %c0_i32_0 = arith.constant 0 : i32
    return %arg0, %arg1, %c0_i32 : i32, i32, i32
  }
  func.func @transform_1(%arg0: i32, %arg1: i32, %arg2: i32, %arg3: memref<2xi32, #tpu.memory_space<smem>>) -> (i32, i32, i32) {
    %c0_i32 = arith.constant 0 : i32
    %c0_i32_0 = arith.constant 0 : i32
    return %arg0, %arg2, %c0_i32 : i32, i32, i32
  }
  func.func @transform_2(%arg0: i32, %arg1: i32, %arg2: i32, %arg3: memref<2xi32, #tpu.memory_space<smem>>) -> (i32, i32, i32) {
    %c0_i32 = arith.constant 0 : i32
    %c0_i32_0 = arith.constant 0 : i32
    return %arg0, %arg2, %c0_i32 : i32, i32, i32
  }
  func.func @transform_3(%arg0: i32, %arg1: i32, %arg2: i32, %arg3: memref<2xi32, #tpu.memory_space<smem>>) -> (i32, i32, i32) {
    %c0_i32 = arith.constant 0 : i32
    %c0_i32_0 = arith.constant 0 : i32
    return %arg0, %arg1, %c0_i32 : i32, i32, i32
  }
}

</mosaic_0001>

<llo_original>
// kernel: tpu_custom_call.1
$region0: #{tpu_custom_call.1}
  #allocation0 [shape = 'u32[]', space=smem, size = 0x4, offset = 0x4, fixed_abs, tag = 'smem constant byte address 0x4 - core index']
  #allocation1 [shape = 'u32[72,128]{1,0:T(1,128)}', space=vmem, size = 0x9000, scoped, tag = 'internal scratch']
  #allocation2 [shape = 'f32[2,8,1]{2,1,0:T(8,128)}', space=vmem, size = 0x2000, scoped, tag = 'scratch operand']
  #allocation3 [shape = 'f32[2,8,1]{2,1,0:T(8,128)}', space=vmem, size = 0x2000, scoped, tag = 'scratch operand']
  #allocation4 [shape = 'f32[2,8,17]{2,1,0:T(8,128)}', space=vmem, size = 0x2000, scoped, tag = 'scratch operand']
  #allocation5 [shape = 'f32[2,8,32]{2,1,0:T(8,128)}', space=vmem, size = 0x2000, scoped, tag = 'scratch operand']
  #allocation6 [shape = 's32[1]{0}', space=sflag, size = 0x4, scoped, tag = 'scoped memory for tpu_custom_call.1']
  #allocation7 [shape = 'u8[512]{0}', space=smem, size = 0x200, scoped, tag = 'prefetched SMEM operand 0']
  %s0 = inlined_call_operand.hbm [shape: s32[2], index: 0, kind: input, shape index: {}]
  %s1 = inlined_call_operand.hbm [shape: f32[2,8,32], index: 1, kind: input, shape index: {}]
  %s2 = inlined_call_operand.hbm [shape: f32[2,8,32], index: 2, kind: input, shape index: {}]
  %s3 = inlined_call_operand.hbm [shape: f32[2,8,17], index: 3, kind: input, shape index: {}]
  %s4 = inlined_call_operand.hbm [shape: f32[2,8,16], index: 4, kind: output, shape index: {}]
  %s5 = sld [smem:[#allocation0]]
  $region42: #{tpu_custom_call.1} parent=0
    _
  %s7 = ssub.s32 1, %s5
  %s8 = scalar_select 0, %s7, %s5
  %s10 = sshll.u32 %s0, 4
  %s11 = int_to_ptr.hbm [resolvable:$true] %s10
  %13 = dma.hbm_to_smem %s11, 16, [#allocation7], [#allocation6]
  %15 = dma.done [#allocation6], 16
  %16 = sfence
  $region1: #{tpu_custom_call.1} parent=0
    #allocation8 [shape = 'u8[8192]{0}', space=vmem, size = 0x2000, scoped, tag = 'input window, operand 1, single buffered']
    #allocation9 [shape = 's32[1]{0}', space=sflag, size = 0x4, scoped, tag = 'scoped memory for tpu_custom_call.1']
    #allocation10 [shape = 's32[1]{0}', space=sflag, size = 0x4, scoped, tag = 'scoped memory for tpu_custom_call.1']
    #allocation11 [shape = 'u8[8192]{0}', space=vmem, size = 0x2000, scoped, tag = 'input window, operand 2, single buffered']
    #allocation12 [shape = 's32[1]{0}', space=sflag, size = 0x4, scoped, tag = 'scoped memory for tpu_custom_call.1']
    #allocation13 [shape = 'u8[8192]{0}', space=vmem, size = 0x2000, scoped, tag = 'input window, operand 3, single buffered']
    #allocation14 [shape = 'u8[8192]{0}', space=vmem, size = 0x2000, scoped, tag = 'output window, operand 0, single buffered']
    %17 = vsyncpa [#allocation9], 0
    %18 = vsyncpa [#allocation12], 0
    %19 = vsyncpa [#allocation10], 0
    // Predicated region
    $region2: #{tpu_custom_call.1} parent=1 // pred_check
      _
    $region3: #{tpu_custom_call.1} parent=1 // pred_check_branch
      %21 = sbr.rel (0) target = $region5
    $region4: #{tpu_custom_call.1} parent=1 // pred_region
      %23 = vsyncadd [#allocation9], 0
      %s24 = sshll.u32 %s1, 4
      %s25 = int_to_ptr.hbm [resolvable:$true] %s24
      %s26 = sshll.u32 [#allocation8], 4
      %s27 = int_to_ptr.vmem [resolvable:$true] %s26
      %32 = dma.hbm_to_vmem [thread:$0]  %s25, 256, %s27, [#allocation9], 128, 128, 8
    $region5: #{tpu_custom_call.1} parent=1 // pred_fallthru
      _
    // Predicated region
    $region6: #{tpu_custom_call.1} parent=1 // pred_check
      _
    $region7: #{tpu_custom_call.1} parent=1 // pred_check_branch
      %34 = sbr.rel (0) target = $region9
    $region8: #{tpu_custom_call.1} parent=1 // pred_region
      %36 = vsyncadd [#allocation12], 0
      %s37 = sshll.u32 %s2, 4
      %s38 = int_to_ptr.hbm [resolvable:$true] %s37
      %s39 = sshll.u32 [#allocation11], 4
      %s40 = int_to_ptr.vmem [resolvable:$true] %s39
      %45 = dma.hbm_to_vmem [thread:$0]  %s38, 256, %s40, [#allocation12], 128, 128, 8
    $region9: #{tpu_custom_call.1} parent=1 // pred_fallthru
      _
    // Predicated region
    $region10: #{tpu_custom_call.1} parent=1 // pred_check
      _
    $region11: #{tpu_custom_call.1} parent=1 // pred_check_branch
      %47 = sbr.rel (0) target = $region13
    $region12: #{tpu_custom_call.1} parent=1 // pred_region
      %49 = vsyncadd [#allocation12], 0
      %s50 = sshll.u32 %s3, 4
      %s51 = int_to_ptr.hbm [resolvable:$true] %s50
      %s52 = sshll.u32 [#allocation13], 4
      %s53 = int_to_ptr.vmem [resolvable:$true] %s52
      %58 = dma.hbm_to_vmem [thread:$0]  %s51, 256, %s53, [#allocation12], 128, 128, 8
    $region13: #{tpu_custom_call.1} parent=1 // pred_fallthru
      _
    // Predicated region
    $region14: #{tpu_custom_call.1} parent=1 // pred_check
      _
    $region15: #{tpu_custom_call.1} parent=1 // pred_check_branch
      %60 = sbr.rel (0) target = $region17
    $region16: #{tpu_custom_call.1} parent=1 // pred_region
      %62 = dma.done [#allocation9], 256
    $region17: #{tpu_custom_call.1} parent=1 // pred_fallthru
      _
    // Predicated region
    $region18: #{tpu_custom_call.1} parent=1 // pred_check
      _
    $region19: #{tpu_custom_call.1} parent=1 // pred_check_branch
      %64 = sbr.rel (0) target = $region21
    $region20: #{tpu_custom_call.1} parent=1 // pred_region
      %66 = dma.done [#allocation12], 256
    $region21: #{tpu_custom_call.1} parent=1 // pred_fallthru
      _
    // Predicated region
    $region22: #{tpu_custom_call.1} parent=1 // pred_check
      _
    $region23: #{tpu_custom_call.1} parent=1 // pred_check_branch
      %68 = sbr.rel (0) target = $region25
    $region24: #{tpu_custom_call.1} parent=1 // pred_region
      %70 = dma.done [#allocation12], 256
    $region25: #{tpu_custom_call.1} parent=1 // pred_fallthru
      _
    %p71 = scmp.eq.s32.totalorder 0, 0
    // Predicated region
    $region26: #{tpu_custom_call.1} parent=1 // pred_check
      %p72 = pneg %p71
    $region27: #{tpu_custom_call.1} parent=1 // pred_check_branch
      %74 = sbr.rel (%p72) target = $region29
    $region28: #{tpu_custom_call.1} parent=1 // pred_region
      %vm75 = vcmask 7168
      %76 = vst.msk [vmem:[#allocation2] sm:$0xff] %vm75, -inf
      %77 = vst.msk [vmem:[#allocation2 + $0x8] sm:$0xff] %vm75, -inf
      %vm78 = vcmask 138240
      %79 = vst.msk [vmem:[#allocation4] sm:$0xff] %vm78, 0.0
      %80 = vst.msk [vmem:[#allocation4 + $0x8] sm:$0xff] %vm78, 0.0
      %v81 = vld [vmem:[#allocation8] sm:$0xff]
      %v82 = vld [vmem:[#allocation8 + $0x8] sm:$0xff]
      %v83 = vmul.f32 %v81, 0.17677669
      %v84 = vmul.f32 %v82, 0.17677669
      %vm85 = vcmask 261120
      %86 = vst.msk [vmem:[#allocation5] sm:$0xff] %vm85, %v83
      %87 = vst.msk [vmem:[#allocation5 + $0x8] sm:$0xff] %vm85, %v84
    $region29: #{tpu_custom_call.1} parent=1 // pred_fallthru
      _
    %v88 = vld [vmem:[#allocation5] sm:$0xff]
    %v89 = vld [vmem:[#allocation5 + $0x8] sm:$0xff]
    %v90 = vld [vmem:[#allocation11] sm:$0xff]
    %v91 = vld [vmem:[#allocation11 + $0x8] sm:$0xff]
    %vm92 = vcmask 261120
    %v94 = vsel %vm92, %v88, 0
    %v97 = vsel %vm92, %v90, 0
    %99 = vmatpush.xpose.msra.mxu0 0.0
    %100 = vmatpush.xpose.msra.mxu0 0.0
    %101 = vmatpush.xpose.msra.mxu0 0.0
    %102 = vmatpush.xpose.msra.mxu0 0.0
    %103 = vmatpush.xpose.msra.mxu0 0.0
    %104 = vmatpush.xpose.msra.mxu0 0.0
    %105 = vmatpush.xpose.msra.mxu0 0.0
    %106 = vmatpush.xpose.msra.mxu0 0.0
    %107 = vmatpush.xpose.msra.mxu0 0.0
    %108 = vmatpush.xpose.msra.mxu0 0.0
    %109 = vmatpush.xpose.msra.mxu0 0.0
    %110 = vmatpush.xpose.msra.mxu0 0.0
    %111 = vmatpush.xpose.msra.mxu0 0.0
    %112 = vmatpush.xpose.msra.mxu0 0.0
    %113 = vmatpush.xpose.msra.mxu0 0.0
    %114 = vmatpush.xpose.msra.mxu0 %v97
    %115 = vmatmul.f32.gmra.mxu0 %v94
    %v116 = vpop.f32.mrf.mxu0
    %v117 = vadd.f32 0.0, %v116
    %118 = vdwg.mxu0
    %v120 = vsel %vm92, %v89, 0
    %v123 = vsel %vm92, %v91, 0
    %125 = vmatpush.xpose.msra.mxu0 0.0
    %126 = vmatpush.xpose.msra.mxu0 0.0
    %127 = vmatpush.xpose.msra.mxu0 0.0
    %128 = vmatpush.xpose.msra.mxu0 0.0
    %129 = vmatpush.xpose.msra.mxu0 0.0
    %130 = vmatpush.xpose.msra.mxu0 0.0
    %131 = vmatpush.xpose.msra.mxu0 0.0
    %132 = vmatpush.xpose.msra.mxu0 0.0
    %133 = vmatpush.xpose.msra.mxu0 0.0
    %134 = vmatpush.xpose.msra.mxu0 0.0
    %135 = vmatpush.xpose.msra.mxu0 0.0
    %136 = vmatpush.xpose.msra.mxu0 0.0
    %137 = vmatpush.xpose.msra.mxu0 0.0
    %138 = vmatpush.xpose.msra.mxu0 0.0
    %139 = vmatpush.xpose.msra.mxu0 0.0
    %140 = vmatpush.xpose.msra.mxu0 %v123
    %141 = vmatmul.f32.gmra.mxu0 %v120
    %v142 = vpop.f32.mrf.mxu0
    %v143 = vadd.f32 0.0, %v142
    %144 = vdwg.mxu0
    %v145 = vlaneseq
    %v146 = vand.u32 %v145, 127
    %s147 = smul.u32 0, 8
    %v148 = vstv %s147
    %v149 = vadd.s32 %v146, %v148
    %s150 = smul.u32 0, 2
    %s151 = sld [smem:[#allocation7 + %s150]]
    %v152 = vstv %s151
    %s153 = sadd.s32 %s150, 1
    %s154 = sld [smem:[#allocation7 + %s153]]
    %v155 = vstv %s154
    %vm156 = vcmp.lt.s32.totalorder %v149, %v152
    %vm157 = vcmp.lt.s32.totalorder %v149, %v155
    %v158 = vsel %vm156, %v117, -1000000.0
    %v159 = vsel %vm157, %v143, -1000000.0
    %v160 = vld [vmem:[#allocation2] sm:$0xff]
    %v161 = vld [vmem:[#allocation2 + $0x8] sm:$0xff]
    %vm162 = vcmask 64512
    %v163 = vsel %vm162, %v158, -inf
    %164 = vmax.xlane.f32.xlu0 %v163
    %v165 = vpop.xlane.xlu0 %164
    %v166 = vsel %vm162, %v159, -inf
    %167 = vmax.xlane.f32.xlu0 %v166
    %v168 = vpop.xlane.xlu0 %167
    %v169 = vmax.f32 %v160, %v165
    %v170 = vmax.f32 %v161, %v168
    %v171 = vsub.f32 %v160, %v169
    %v172 = vsub.f32 %v161, %v170
    %v173 = vmul.f32 %v171, 1.442695
    %v174 = vpow.pop %v173
    %v175 = vmul.f32 %v172, 1.442695
    %v176 = vpow.pop %v175
    %178 = vset.pattern.permute.xlu0 0
    %179 = vperm.xlu0 %178, %v169
    %v180 = vpop.permute.xlu0 %179
    %183 = vset.pattern.permute.xlu0 0
    %184 = vperm.xlu0 %183, %v170
    %v185 = vpop.permute.xlu0 %184
    %v187 = vsub.f32 %v158, %v180
    %v188 = vsub.f32 %v159, %v185
    %v189 = vmul.f32 %v187, 1.442695
    %v190 = vpow.pop %v189
    %v191 = vmul.f32 %v188, 1.442695
    %v192 = vpow.pop %v191
    %v193 = vld [vmem:[#allocation13] sm:$0xff]
    %v194 = vld [vmem:[#allocation13 + $0x8] sm:$0xff]
    %v196 = vsel %vm162, %v190, 0
    %198 = vmatpush.msra.mxu0 0.0
    %199 = vmatpush.msra.mxu0 0.0
    %200 = vmatpush.msra.mxu0 0.0
    %201 = vmatpush.msra.mxu0 0.0
    %202 = vmatpush.msra.mxu0 0.0
    %203 = vmatpush.msra.mxu0 0.0
    %204 = vmatpush.msra.mxu0 0.0
    %205 = vmatpush.msra.mxu0 0.0
    %206 = vmatpush.msra.mxu0 0.0
    %207 = vmatpush.msra.mxu0 0.0
    %208 = vmatpush.msra.mxu0 0.0
    %209 = vmatpush.msra.mxu0 0.0
    %210 = vmatpush.msra.mxu0 0.0
    %211 = vmatpush.msra.mxu0 0.0
    %212 = vmatpush.msra.mxu0 0.0
    %213 = vmatpush.msra.mxu0 %v193
    %214 = vmatmul.f32.gmra.mxu0 %v196
    %v215 = vpop.f32.mrf.mxu0
    %v216 = vadd.f32 0.0, %v215
    %217 = vdwg.mxu0
    %v219 = vsel %vm162, %v192, 0
    %221 = vmatpush.msra.mxu0 0.0
    %222 = vmatpush.msra.mxu0 0.0
    %223 = vmatpush.msra.mxu0 0.0
    %224 = vmatpush.msra.mxu0 0.0
    %225 = vmatpush.msra.mxu0 0.0
    %226 = vmatpush.msra.mxu0 0.0
    %227 = vmatpush.msra.mxu0 0.0
    %228 = vmatpush.msra.mxu0 0.0
    %229 = vmatpush.msra.mxu0 0.0
    %230 = vmatpush.msra.mxu0 0.0
    %231 = vmatpush.msra.mxu0 0.0
    %232 = vmatpush.msra.mxu0 0.0
    %233 = vmatpush.msra.mxu0 0.0
    %234 = vmatpush.msra.mxu0 0.0
    %235 = vmatpush.msra.mxu0 0.0
    %236 = vmatpush.msra.mxu0 %v194
    %237 = vmatmul.f32.gmra.mxu0 %v219
    %v238 = vpop.f32.mrf.mxu0
    %v239 = vadd.f32 0.0, %v238
    %240 = vdwg.mxu0
    %v241 = vld [vmem:[#allocation4] sm:$0xff]
    %v242 = vld [vmem:[#allocation4 + $0x8] sm:$0xff]
    %244 = vset.pattern.permute.xlu0 0
    %245 = vperm.xlu0 %244, %v174
    %v246 = vpop.permute.xlu0 %245
    %249 = vset.pattern.permute.xlu0 0
    %250 = vperm.xlu0 %249, %v176
    %v251 = vpop.permute.xlu0 %250
    %v253 = vmul.f32 %v246, %v241
    %v254 = vmul.f32 %v251, %v242
    %v255 = vadd.f32 %v253, %v216
    %v256 = vadd.f32 %v254, %v239
    %vm257 = vcmask 138240
    %258 = vst.msk [vmem:[#allocation4] sm:$0xff] %vm257, %v255
    %259 = vst.msk [vmem:[#allocation4 + $0x8] sm:$0xff] %vm257, %v256
    %vm260 = vcmask 7168
    %261 = vst.msk [vmem:[#allocation2] sm:$0xff] %vm260, %v169
    %262 = vst.msk [vmem:[#allocation2 + $0x8] sm:$0xff] %vm260, %v170
    // Predicated region
    $region30: #{tpu_custom_call.1} parent=1 // pred_check
      %p263 = pneg %p71
    $region31: #{tpu_custom_call.1} parent=1 // pred_check_branch
      %265 = sbr.rel (%p263) target = $region33
    $region32: #{tpu_custom_call.1} parent=1 // pred_region
      %v266 = vld [vmem:[#allocation4] sm:$0xff]
      %v267 = vld [vmem:[#allocation4 + $0x8] sm:$0xff]
      %v268 = vrcp.pop %v266
      %v269 = vmul.f32 %v266, %v268
      %v270 = vsub.f32 1.0, %v269
      %v271 = vmul.f32 %v268, %v270
      %v272 = vadd.f32 %v268, %v271
      %vm273 = vweird.f32 %v266
      %vm274 = vweird.f32 %v268
      %vm275 = vmor %vm273, %vm274
      %v276 = vsel %vm275, %v268, %v272
      %v277 = vand.u32 2147483647, %v266
      %vm278 = vcmp.eq.f32.partialorder %v277, 8.507059e+37
      %v279 = vand.u32 %v266, 2147483648
      %v280 = vor.u32 1.1754944e-38, %v279
      %v281 = vsel %vm278, %v280, %v276
      %v282 = vrcp.pop %v267
      %v283 = vmul.f32 %v267, %v282
      %v284 = vsub.f32 1.0, %v283
      %v285 = vmul.f32 %v282, %v284
      %v286 = vadd.f32 %v282, %v285
      %vm287 = vweird.f32 %v267
      %vm288 = vweird.f32 %v282
      %vm289 = vmor %vm287, %vm288
      %v290 = vsel %vm289, %v282, %v286
      %v291 = vand.u32 2147483647, %v267
      %vm292 = vcmp.eq.f32.partialorder %v291, 8.507059e+37
      %v293 = vand.u32 %v267, 2147483648
      %v294 = vor.u32 1.1754944e-38, %v293
      %v295 = vsel %vm292, %v294, %v290
      %297 = vset.pattern.permute.xlu0 16
      %298 = vperm.xlu0 %297, %v281
      %v299 = vpop.permute.xlu0 %298
      %302 = vset.pattern.permute.xlu0 16
      %303 = vperm.xlu0 %302, %v295
      %v304 = vpop.permute.xlu0 %303
      %v306 = vmul.f32 %v266, %v299
      %v307 = vmul.f32 %v267, %v304
      %vm308 = vcmask 130048
      %309 = vst.msk [vmem:[#allocation14] sm:$0xff] %vm308, %v306
      %310 = vst.msk [vmem:[#allocation14 + $0x8] sm:$0xff] %vm308, %v307
    $region33: #{tpu_custom_call.1} parent=1 // pred_fallthru
      _
    // Predicated region
    $region34: #{tpu_custom_call.1} parent=1 // pred_check
      _
    $region35: #{tpu_custom_call.1} parent=1 // pred_check_branch
      %312 = sbr.rel (0) target = $region37
    $region36: #{tpu_custom_call.1} parent=1 // pred_region
      %314 = vsyncadd [#allocation10], 0
      %s315 = sshll.u32 [#allocation14], 4
      %s316 = int_to_ptr.vmem [resolvable:$true] %s315
      %s317 = sshll.u32 %s4, 4
      %s318 = int_to_ptr.hbm [resolvable:$true] %s317
      %323 = dma.vmem_to_hbm [thread:$0]  %s316, 256, %s318, [#allocation10], 128, 128, 8
    $region37: #{tpu_custom_call.1} parent=1 // pred_fallthru
      _
    // Predicated region
    $region38: #{tpu_custom_call.1} parent=1 // pred_check
      _
    $region39: #{tpu_custom_call.1} parent=1 // pred_check_branch
      %325 = sbr.rel (0) target = $region41
    $region40: #{tpu_custom_call.1} parent=1 // pred_region
      %327 = dma.done [#allocation10], 256
    $region41: #{tpu_custom_call.1} parent=1 // pred_fallthru
      _
    %328 = vsyncpa [#allocation9], 1
    %329 = vsyncpa [#allocation12], 1
    %330 = vsyncpa [#allocation10], 1

</llo_original>
